<compile_context>
chip_gen: v7x
topology: tpu7x:2x2x1
jax: 0.10.0
libtpu: 0.0.40
codegen_flags: <defaults>
</compile_context>

<pallas_src>
import jax
import jax.numpy as jnp
from jax.experimental import pallas as pl
from jax.experimental.pallas import tpu as pltpu


def lanenet_kernel(x_ref, we_ref, be_ref, wh_ref, bh_ref, bin_ref, emb_ref):
    # x_ref: (C_in, TM) tile — channels on sublanes, pixels lane-dense.
    # MXU operands follow the (optionally bf16) weight dtype; accumulate f32.
    x = x_ref[...].astype(we_ref.dtype)

    # encoder: 1x1 conv == per-pixel linear (channels-first), then ReLU
    feat = jnp.dot(we_ref[...], x, preferred_element_type=jnp.float32)
    feat = jnp.maximum(feat + be_ref[...], 0.0)       # bias (feat_ch,1) bcast

    # both decoder heads in ONE MXU contraction, then split rows.
    logits = jnp.dot(wh_ref[...], feat.astype(wh_ref.dtype),
                     preferred_element_type=jnp.float32)
    logits = logits + bh_ref[...]

    nc = bin_ref.shape[0]                             # static num_classes
    bin_ref[...] = jax.nn.sigmoid(logits[:nc, :]).astype(bin_ref.dtype)
    emb_ref[...] = jnp.tanh(logits[nc:, :]).astype(emb_ref.dtype)


def lanenet_forward(x_nchw, params, *, tm=16384, out_dtype=None,
                    matmul_dtype=None):
    """x_nchw: (N, C_in, H, W).  Returns (binary_mask, embeddings) in NCHW.

    tm:           pixel-tile size (lane dim); rounded to a multiple of 128.
    out_dtype:    e.g. jnp.bfloat16 to halve output HBM traffic (f32 math
                  internally).  Defaults to the input dtype.
    matmul_dtype: e.g. jnp.bfloat16 for the MXU operands (f32 accumulation
                  is kept).  Default None == exact f32 operands.
    """
    w_enc, b_enc, w_bin, b_bin, w_emb, b_emb = params
    N, C_in, H, W = x_nchw.shape
    feat_ch = w_enc.shape[1]
    num_classes = w_bin.shape[1]
    emb_dim = w_emb.shape[1]
    out_dtype = x_nchw.dtype if out_dtype is None else jnp.dtype(out_dtype)
    w_dtype = jnp.float32 if matmul_dtype is None else jnp.dtype(matmul_dtype)

    # Pack parameters once into the pixels-last layout.
    w_enc_t = w_enc.T.astype(w_dtype)                       # (feat_ch, C_in)
    b_enc_c = b_enc.reshape(feat_ch, 1).astype(jnp.float32)
    w_heads = jnp.concatenate([w_bin.T, w_emb.T], axis=0).astype(w_dtype)
    b_heads = jnp.concatenate(
        [b_bin.reshape(-1), b_emb.reshape(-1)]
    ).reshape(num_classes + emb_dim, 1).astype(jnp.float32)

    HW = H * W
    # Pixel tile: multiple of 128 (lane dim), clamped to the 128-rounded extent.
    tm = max(128, (int(tm) // 128) * 128)
    tm = min(tm, pl.cdiv(HW, 128) * 128)
    # v7x megacore balance: keep >= 8 total grid steps when the problem is big
    # enough that shrinking the tile costs nothing (single-TC chips unaffected
    # in practice since we never go below 4096 pixels per step).
    while N * pl.cdiv(HW, tm) < 8 and tm > 4096:
        tm = max(4096, (tm // 2 // 128) * 128)

    # NCHW -> (N, C_in, H*W): pure reshape, no transpose / extra HBM traffic.
    # No jnp.pad and no post-call slicing: Pallas clips the ragged final pixel
    # tile (partial-block DMAs), so tail lanes are never written to the output.
    x = x_nchw.reshape(N, C_in, HW)

    grid = (N, pl.cdiv(HW, tm))                       # both axes independent
    full = lambda n, j: (0, 0)                        # small resident params
    tile = lambda n, j: (n, 0, j)                     # tile over pixels

    out_itemsize = jnp.dtype(out_dtype).itemsize
    cost = pl.CostEstimate(
        flops=2 * N * HW * (C_in * feat_ch
                            + feat_ch * (num_classes + emb_dim)),
        transcendentals=N * HW * (num_classes + emb_dim),
        bytes_accessed=N * HW * (C_in * x.dtype.itemsize
                                 + (num_classes + emb_dim) * out_itemsize),
    )

    binary, emb = pl.pallas_call(
        lanenet_kernel,
        out_shape=(
            jax.ShapeDtypeStruct((N, num_classes, HW), out_dtype),
            jax.ShapeDtypeStruct((N, emb_dim, HW), out_dtype),
        ),
        grid_spec=pltpu.PrefetchScalarGridSpec(
            num_scalar_prefetch=0,
            grid=grid,
            in_specs=[
                pl.BlockSpec((None, C_in, tm), tile),               # x
                pl.BlockSpec((feat_ch, C_in), full),                # W_enc^T
                pl.BlockSpec((feat_ch, 1), full),                   # b_enc
                pl.BlockSpec((num_classes + emb_dim, feat_ch), full),   # W_heads
                pl.BlockSpec((num_classes + emb_dim, 1), full),         # b_heads
            ],
            out_specs=[
                pl.BlockSpec((None, num_classes, tm), tile),
                pl.BlockSpec((None, emb_dim, tm), tile),
            ],
        ),
        compiler_params=pltpu.CompilerParams(
            dimension_semantics=("parallel", "parallel"),
            vmem_limit_bytes=32 * 1024 * 1024),
        cost_estimate=cost,
    )(x, w_enc_t, b_enc_c, w_heads, b_heads)

    # Outputs are already NCHW once the pixel axis is unflattened.
    binary_mask = binary.reshape(N, num_classes, H, W)
    embeddings = emb.reshape(N, emb_dim, H, W)
    return binary_mask, embeddings


def init_params(key, c_in, feat_ch, num_classes, emb_dim):
    k1, k2, k3, k4, k5, k6 = jax.random.split(key, 6)
    scale = 0.1
    w_enc = scale * jax.random.normal(k1, (c_in, feat_ch), jnp.float32)
    b_enc = scale * jax.random.normal(k2, (1, feat_ch), jnp.float32)
    w_bin = scale * jax.random.normal(k3, (feat_ch, num_classes), jnp.float32)
    b_bin = scale * jax.random.normal(k4, (1, num_classes), jnp.float32)
    w_emb = scale * jax.random.normal(k5, (feat_ch, emb_dim), jnp.float32)
    b_emb = scale * jax.random.normal(k6, (1, emb_dim), jnp.float32)
    return (w_enc, b_enc, w_bin, b_bin, w_emb, b_emb)


def reference_forward(x_nchw, params):
    """Pure-JAX reference for validation."""
    w_enc, b_enc, w_bin, b_bin, w_emb, b_emb = params
    N, C_in, H, W = x_nchw.shape
    x_flat = jnp.transpose(x_nchw, (0, 2, 3, 1)).reshape(-1, C_in)
    feat = jnp.maximum(x_flat @ w_enc + b_enc, 0.0)
    binary = jax.nn.sigmoid(feat @ w_bin + b_bin)
    emb = jnp.tanh(feat @ w_emb + b_emb)
    binary = jnp.transpose(binary.reshape(N, H, W, -1), (0, 3, 1, 2))
    emb = jnp.transpose(emb.reshape(N, H, W, -1), (0, 3, 1, 2))
    return binary, emb


if __name__ == "__main__":
    # Small shapes consistent with the module's forward:
    #   x: (N=2, C_in=4, H=16, W=16), feature channels=32,
    #   num_classes=2, embedding_dim=4
    N, C_IN, H, W = 2, 4, 16, 16
    FEAT_CH, NUM_CLASSES, EMB_DIM = 32, 2, 4

    key = jax.random.PRNGKey(0)
    kx, kp, kx2 = jax.random.split(key, 3)
    x = jax.random.normal(kx, (N, C_IN, H, W), jnp.float32)
    params = init_params(kp, C_IN, FEAT_CH, NUM_CLASSES, EMB_DIM)

    # --- exact f32 path -----------------------------------------------------
    fwd = jax.jit(lanenet_forward)
    binary_mask, embeddings = fwd(x, params)
    jax.block_until_ready((binary_mask, embeddings))

    ref_binary, ref_emb = reference_forward(x, params)
    assert binary_mask.shape == (N, NUM_CLASSES, H, W)
    assert embeddings.shape == (N, EMB_DIM, H, W)
    assert jnp.allclose(binary_mask, ref_binary, atol=1e-5, rtol=1e-5)
    assert jnp.allclose(embeddings, ref_emb, atol=1e-5, rtol=1e-5)

    # --- ragged pixel tail (HW not a multiple of tm): no pad, no slices -----
    H2, W2 = 16, 18                                   # HW = 288, tm = 256
    x2 = jax.random.normal(kx2, (1, C_IN, H2, W2), jnp.float32)
    fwd_ragged = jax.jit(lambda a, p: lanenet_forward(a, p, tm=256))
    bin2, emb2 = fwd_ragged(x2, params)
    jax.block_until_ready((bin2, emb2))
    ref_bin2, ref_emb2 = reference_forward(x2, params)
    assert jnp.allclose(bin2, ref_bin2, atol=1e-5, rtol=1e-5)
    assert jnp.allclose(emb2, ref_emb2, atol=1e-5, rtol=1e-5)

    # --- reduced-precision HBM path (bf16 outputs + bf16 MXU operands) ------
    fwd_bf16 = jax.jit(lambda a, p: lanenet_forward(
        a, p, out_dtype=jnp.bfloat16, matmul_dtype=jnp.bfloat16))
    bin_bf16, emb_bf16 = fwd_bf16(x, params)
    jax.block_until_ready((bin_bf16, emb_bf16))
    assert bin_bf16.dtype == jnp.bfloat16 and emb_bf16.dtype == jnp.bfloat16
    assert jnp.allclose(bin_bf16.astype(jnp.float32), ref_binary, atol=2e-2)
    assert jnp.allclose(emb_bf16.astype(jnp.float32), ref_emb, atol=2e-2)

    print("KERNEL_OK")
</pallas_src>

<mosaic_0001>
module attributes {stable_mosaic.version = 11 : i64} {
  func.func @lanenet_kernel(%arg0: i32, %arg1: i32, %arg2: memref<1x4x256xf32, #tpu.memory_space<vmem>>, %arg3: memref<32x4xf32, #tpu.memory_space<vmem>>, %arg4: memref<32x1xf32, #tpu.memory_space<vmem>>, %arg5: memref<6x32xf32, #tpu.memory_space<vmem>>, %arg6: memref<6x1xf32, #tpu.memory_space<vmem>>, %arg7: memref<1x2x256xf32, #tpu.memory_space<vmem>>, %arg8: memref<1x4x256xf32, #tpu.memory_space<vmem>>) attributes {dimension_semantics = [#tpu.dimension_semantics<parallel>, #tpu.dimension_semantics<parallel>], iteration_bounds = array<i64: 2, 1>, scalar_prefetch = 0 : i64, scratch_operands = 0 : i64, tpu.core_type = #tpu.core_type<tc>, window_params = [{transform_indices = @transform_0, window_bounds = array<i64: 1, 4, 256>}, {pipeline_mode = #tpu.pipeline_mode<synchronous>, transform_indices = @transform_1, window_bounds = array<i64: 32, 4>}, {pipeline_mode = #tpu.pipeline_mode<synchronous>, transform_indices = @transform_2, window_bounds = array<i64: 32, 1>}, {pipeline_mode = #tpu.pipeline_mode<synchronous>, transform_indices = @transform_3, window_bounds = array<i64: 6, 32>}, {pipeline_mode = #tpu.pipeline_mode<synchronous>, transform_indices = @transform_4, window_bounds = array<i64: 6, 1>}, {transform_indices = @transform_5, window_bounds = array<i64: 1, 2, 256>}, {transform_indices = @transform_6, window_bounds = array<i64: 1, 4, 256>}]} {
    %c0 = arith.constant 0 : index
    %c0_0 = arith.constant 0 : index
    %c0_1 = arith.constant 0 : index
    %0 = vector.load %arg2[%c0, %c0_0, %c0_1] : memref<1x4x256xf32, #tpu.memory_space<vmem>>, vector<1x4x256xf32>
    %1 = vector.shape_cast %0 : vector<1x4x256xf32> to vector<4x256xf32>
    %c0_2 = arith.constant 0 : index
    %c0_3 = arith.constant 0 : index
    %2 = vector.load %arg3[%c0_2, %c0_3] : memref<32x4xf32, #tpu.memory_space<vmem>>, vector<32x4xf32>
    %cst = arith.constant dense<0.000000e+00> : vector<32x256xf32>
    %3 = tpu.matmul %2, %1, %cst {dimension_numbers = #tpu.dot_dimension_numbers<[1], [0], [0], [1], [0, 0, 1, 1], [], []>} : vector<32x4xf32>, vector<4x256xf32>, vector<32x256xf32> -> vector<32x256xf32>
    %c0_4 = arith.constant 0 : index
    %c0_5 = arith.constant 0 : index
    %4 = vector.load %arg4[%c0_4, %c0_5] : memref<32x1xf32, #tpu.memory_space<vmem>>, vector<32x1xf32>
    %5 = vector.broadcast %4 : vector<32x1xf32> to vector<32x256xf32>
    %6 = arith.addf %3, %5 : vector<32x256xf32>
    %cst_6 = arith.constant 0.000000e+00 : f32
    %7 = vector.broadcast %cst_6 : f32 to vector<32x256xf32>
    %8 = arith.maximumf %6, %7 : vector<32x256xf32>
    %c0_7 = arith.constant 0 : index
    %c0_8 = arith.constant 0 : index
    %9 = vector.load %arg5[%c0_7, %c0_8] : memref<6x32xf32, #tpu.memory_space<vmem>>, vector<6x32xf32>
    %cst_9 = arith.constant dense<0.000000e+00> : vector<6x256xf32>
    %10 = tpu.matmul %9, %8, %cst_9 {dimension_numbers = #tpu.dot_dimension_numbers<[1], [0], [0], [1], [0, 0, 1, 1], [], []>} : vector<6x32xf32>, vector<32x256xf32>, vector<6x256xf32> -> vector<6x256xf32>
    %c0_10 = arith.constant 0 : index
    %c0_11 = arith.constant 0 : index
    %11 = vector.load %arg6[%c0_10, %c0_11] : memref<6x1xf32, #tpu.memory_space<vmem>>, vector<6x1xf32>
    %12 = vector.broadcast %11 : vector<6x1xf32> to vector<6x256xf32>
    %13 = arith.addf %10, %12 : vector<6x256xf32>
    %14 = vector.extract_strided_slice %13 {offsets = [0, 0], sizes = [2, 256], strides = [1, 1]} : vector<6x256xf32> to vector<2x256xf32>
    %15 = arith.negf %14 : vector<2x256xf32>
    %16 = math.exp %15 : vector<2x256xf32>
    %cst_12 = arith.constant 1.000000e+00 : f32
    %17 = vector.broadcast %cst_12 : f32 to vector<2x256xf32>
    %18 = arith.addf %17, %16 : vector<2x256xf32>
    %19 = arith.divf %17, %18 : vector<2x256xf32>
    %c0_13 = arith.constant 0 : index
    %c0_14 = arith.constant 0 : index
    %c0_15 = arith.constant 0 : index
    %20 = vector.load %arg7[%c0_13, %c0_14, %c0_15] : memref<1x2x256xf32, #tpu.memory_space<vmem>>, vector<1x2x256xf32>
    %21 = vector.shape_cast %20 : vector<1x2x256xf32> to vector<2x256xf32>
    %22 = vector.shape_cast %19 : vector<2x256xf32> to vector<1x2x256xf32>
    tpu.vector_store %arg7[%c0_13, %c0_14, %c0_15], %22 {strides = array<i32>} : memref<1x2x256xf32, #tpu.memory_space<vmem>>, vector<1x2x256xf32>,
    %23 = vector.extract_strided_slice %13 {offsets = [2, 0], sizes = [4, 256], strides = [1, 1]} : vector<6x256xf32> to vector<4x256xf32>
    %24 = math.tanh %23 : vector<4x256xf32>
    %c0_16 = arith.constant 0 : index
    %c0_17 = arith.constant 0 : index
    %c0_18 = arith.constant 0 : index
    %25 = vector.load %arg8[%c0_16, %c0_17, %c0_18] : memref<1x4x256xf32, #tpu.memory_space<vmem>>, vector<1x4x256xf32>
    %26 = vector.shape_cast %25 : vector<1x4x256xf32> to vector<4x256xf32>
    %27 = vector.shape_cast %24 : vector<4x256xf32> to vector<1x4x256xf32>
    tpu.vector_store %arg8[%c0_16, %c0_17, %c0_18], %27 {strides = array<i32>} : memref<1x4x256xf32, #tpu.memory_space<vmem>>, vector<1x4x256xf32>,
    return
  }
  func.func @transform_0(%arg0: i32, %arg1: i32) -> (i32, i32, i32) {
    %c0_i32 = arith.constant 0 : i32
    %c0_i32_0 = arith.constant 0 : i32
    return %arg0, %c0_i32, %arg1 : i32, i32, i32
  }
  func.func @transform_1(%arg0: i32, %arg1: i32) -> (i32, i32) {
    %c0_i32 = arith.constant 0 : i32
    %c0_i32_0 = arith.constant 0 : i32
    %c0_i32_1 = arith.constant 0 : i32
    return %c0_i32, %c0_i32_0 : i32, i32
  }
  func.func @transform_2(%arg0: i32, %arg1: i32) -> (i32, i32) {
    %c0_i32 = arith.constant 0 : i32
    %c0_i32_0 = arith.constant 0 : i32
    %c0_i32_1 = arith.constant 0 : i32
    return %c0_i32, %c0_i32_0 : i32, i32
  }
  func.func @transform_3(%arg0: i32, %arg1: i32) -> (i32, i32) {
    %c0_i32 = arith.constant 0 : i32
    %c0_i32_0 = arith.constant 0 : i32
    %c0_i32_1 = arith.constant 0 : i32
    return %c0_i32, %c0_i32_0 : i32, i32
  }
  func.func @transform_4(%arg0: i32, %arg1: i32) -> (i32, i32) {
    %c0_i32 = arith.constant 0 : i32
    %c0_i32_0 = arith.constant 0 : i32
    %c0_i32_1 = arith.constant 0 : i32
    return %c0_i32, %c0_i32_0 : i32, i32
  }
  func.func @transform_5(%arg0: i32, %arg1: i32) -> (i32, i32, i32) {
    %c0_i32 = arith.constant 0 : i32
    %c0_i32_0 = arith.constant 0 : i32
    return %arg0, %c0_i32, %arg1 : i32, i32, i32
  }
  func.func @transform_6(%arg0: i32, %arg1: i32) -> (i32, i32, i32) {
    %c0_i32 = arith.constant 0 : i32
    %c0_i32_0 = arith.constant 0 : i32
    return %arg0, %c0_i32, %arg1 : i32, i32, i32
  }
}

</mosaic_0001>

<llo_original>
// kernel: lanenet_forward.1
$region0: #{lanenet_forward.1}
  #allocation0 [shape = 'u32[]', space=smem, size = 0x4, offset = 0x4, fixed_abs, tag = 'smem constant byte address 0x4 - core index']
  #allocation1 [shape = 'u32[144,128]{1,0:T(1,128)}', space=vmem, size = 0x12000, scoped, tag = 'internal scratch']
  %s0 = inlined_call_operand.vmem [shape: f32[2,4,256], index: 0, kind: input, shape index: {}]
  %s1 = inlined_call_operand.vmem [shape: f32[32,4], index: 1, kind: input, shape index: {}]
  %s2 = inlined_call_operand.vmem [shape: f32[32,1], index: 2, kind: input, shape index: {}]
  %s3 = inlined_call_operand.vmem [shape: f32[6,32], index: 3, kind: input, shape index: {}]
  %s4 = inlined_call_operand.vmem [shape: f32[6,1], index: 4, kind: input, shape index: {}]
  %s5 = inlined_call_operand.vmem [shape: f32[2,2,256], index: 5, kind: output, shape index: {0}]
  %s6 = inlined_call_operand.vmem [shape: f32[2,4,256], index: 6, kind: output, shape index: {1}]
  %7 = xla_tuple %s5, %s6
  %s8 = sld [smem:[#allocation0]]
  $region61: #{lanenet_forward.1} parent=0
    _
  %s10 = ssub.s32 1, %s8
  %s11 = scalar_select 0, %s10, %s8
  loop: start=0, step=1, limit=4
  $region2: #{lanenet_forward.1} parent=0 // loop_pre_header
    _
  $region3: #{lanenet_forward.1} parent=0 // loop_header
    %s13 = sphi 0, %s17
    %p14 = scmp.ge.s32.totalorder %s13, 4
    %s20 = sphi 0, %s32
    %s21 = sphi 0, %s28
    %s22 = sphi 0, %s20
    %s23 = sphi 0, %s21
    %s24 = sphi 0, %s22
    %s25 = sphi 0, %s23
    %s37 = sphi 0, %s39
    %s40 = sphi 0, %s37
    %s41 = sphi 0, %s40
    %s57 = sphi 0, %s41
    %s61 = sphi 0, %s61
    %s63 = sphi 0, %s61
    %s64 = sphi 0, %s63
    %s78 = sphi 0, %s64
    %s82 = sphi 0, %s82
    %s84 = sphi 0, %s82
    %s85 = sphi 0, %s84
    %s99 = sphi 0, %s85
    %s103 = sphi 0, %s103
    %s105 = sphi 0, %s103
    %s106 = sphi 0, %s105
    %s120 = sphi 0, %s106
    %s124 = sphi 0, %s124
    %s126 = sphi 0, %s124
    %s127 = sphi 0, %s126
    %s141 = sphi 0, %s127
    %s149 = sphi 0, %s151
    %s152 = sphi 0, %s149
    %s153 = sphi 0, %s152
    %s169 = sphi 0, %s153
    %s177 = sphi 0, %s179
    %s180 = sphi 0, %s177
    %s181 = sphi 0, %s180
    %s197 = sphi 0, %s181
  $region4: #{lanenet_forward.1} parent=0 // loop_header_branch
    %16 = sbr.rel (%p14) target = $region8
  $region5: #{lanenet_forward.1} parent=0 // loop_body
    %s18 = ssub.s32 %s13, 1
    %s19 = ssub.s32 %s13, 2
    %s26 = sadd.s32 1, %s21
    %p27 = scmp.ge.s32.totalorder %s26, 1
    %s28 = scalar_select %p27, 0, %s26
    %s29 = sadd.s32 1, %s20
    %s30 = scalar_select %p27, %s29, %s20
    %p31 = scmp.ge.s32.totalorder %s30, 2
    %s32 = scalar_select %p31, 0, %s30
    %s33 = ssub.s32 %s20, %s32
    %s34 = ssub.s32 %s21, %s28
    %s35 = sor.u32 %s33, %s34
    %p36 = scmp.eq.s32.totalorder %s35, 0
    %s38 = sadd.s32 %s37, 1
    %s39 = scalar_select %p36, %s37, %s38
    %p42 = pneg %p36
    %p43 = scmp.eq.s32.totalorder %s13, 1
    %p44 = por %p42, %p43
    %p45 = scmp.ne.s32.totalorder %s37, %s40
    %p46 = scmp.eq.s32.totalorder %s13, 0
    %p47 = por %p45, %p46
    %p48 = scmp.ne.s32.totalorder %s37, %s40
    %p49 = scmp.eq.s32.totalorder %s18, 1
    %p50 = por %p48, %p49
    %p51 = scmp.ne.s32.totalorder %s40, %s41
    %p52 = scmp.eq.s32.totalorder %s18, 0
    %p53 = por %p51, %p52
    %p54 = scmp.ne.s32.totalorder %s40, %s41
    %p55 = scmp.eq.s32.totalorder %s19, 1
    %p56 = por %p54, %p55
    %p58 = scmp.ne.s32.totalorder %s41, %s57
    %p59 = scmp.eq.s32.totalorder %s19, 0
    %p60 = por %p58, %p59
    %s62 = sadd.s32 %s61, 1
    %p65 = scmp.eq.s32.totalorder %s13, 1
    %p66 = scmp.ne.s32.totalorder %s61, %s63
    %p67 = scmp.eq.s32.totalorder %s13, 0
    %p68 = por %p66, %p67
    %p69 = scmp.ne.s32.totalorder %s61, %s63
    %p70 = scmp.eq.s32.totalorder %s18, 1
    %p71 = por %p69, %p70
    %p72 = scmp.ne.s32.totalorder %s63, %s64
    %p73 = scmp.eq.s32.totalorder %s18, 0
    %p74 = por %p72, %p73
    %p75 = scmp.ne.s32.totalorder %s63, %s64
    %p76 = scmp.eq.s32.totalorder %s19, 1
    %p77 = por %p75, %p76
    %p79 = scmp.ne.s32.totalorder %s64, %s78
    %p80 = scmp.eq.s32.totalorder %s19, 0
    %p81 = por %p79, %p80
    %s83 = sadd.s32 %s82, 1
    %p86 = scmp.eq.s32.totalorder %s13, 1
    %p87 = scmp.ne.s32.totalorder %s82, %s84
    %p88 = scmp.eq.s32.totalorder %s13, 0
    %p89 = por %p87, %p88
    %p90 = scmp.ne.s32.totalorder %s82, %s84
    %p91 = scmp.eq.s32.totalorder %s18, 1
    %p92 = por %p90, %p91
    %p93 = scmp.ne.s32.totalorder %s84, %s85
    %p94 = scmp.eq.s32.totalorder %s18, 0
    %p95 = por %p93, %p94
    %p96 = scmp.ne.s32.totalorder %s84, %s85
    %p97 = scmp.eq.s32.totalorder %s19, 1
    %p98 = por %p96, %p97
    %p100 = scmp.ne.s32.totalorder %s85, %s99
    %p101 = scmp.eq.s32.totalorder %s19, 0
    %p102 = por %p100, %p101
    %s104 = sadd.s32 %s103, 1
    %p107 = scmp.eq.s32.totalorder %s13, 1
    %p108 = scmp.ne.s32.totalorder %s103, %s105
    %p109 = scmp.eq.s32.totalorder %s13, 0
    %p110 = por %p108, %p109
    %p111 = scmp.ne.s32.totalorder %s103, %s105
    %p112 = scmp.eq.s32.totalorder %s18, 1
    %p113 = por %p111, %p112
    %p114 = scmp.ne.s32.totalorder %s105, %s106
    %p115 = scmp.eq.s32.totalorder %s18, 0
    %p116 = por %p114, %p115
    %p117 = scmp.ne.s32.totalorder %s105, %s106
    %p118 = scmp.eq.s32.totalorder %s19, 1
    %p119 = por %p117, %p118
    %p121 = scmp.ne.s32.totalorder %s106, %s120
    %p122 = scmp.eq.s32.totalorder %s19, 0
    %p123 = por %p121, %p122
    %s125 = sadd.s32 %s124, 1
    %p128 = scmp.eq.s32.totalorder %s13, 1
    %p129 = scmp.ne.s32.totalorder %s124, %s126
    %p130 = scmp.eq.s32.totalorder %s13, 0
    %p131 = por %p129, %p130
    %p132 = scmp.ne.s32.totalorder %s124, %s126
    %p133 = scmp.eq.s32.totalorder %s18, 1
    %p134 = por %p132, %p133
    %p135 = scmp.ne.s32.totalorder %s126, %s127
    %p136 = scmp.eq.s32.totalorder %s18, 0
    %p137 = por %p135, %p136
    %p138 = scmp.ne.s32.totalorder %s126, %s127
    %p139 = scmp.eq.s32.totalorder %s19, 1
    %p140 = por %p138, %p139
    %p142 = scmp.ne.s32.totalorder %s127, %s141
    %p143 = scmp.eq.s32.totalorder %s19, 0
    %p144 = por %p142, %p143
    %s145 = ssub.s32 %s20, %s32
    %s146 = ssub.s32 %s21, %s28
    %s147 = sor.u32 %s145, %s146
    %p148 = scmp.eq.s32.totalorder %s147, 0
    %s150 = sadd.s32 %s149, 1
    %s151 = scalar_select %p148, %s149, %s150
    %p154 = pneg %p148
    %p155 = scmp.eq.s32.totalorder %s13, 1
    %p156 = por %p154, %p155
    %p157 = scmp.ne.s32.totalorder %s149, %s152
    %p158 = scmp.eq.s32.totalorder %s13, 0
    %p159 = por %p157, %p158
    %p160 = scmp.ne.s32.totalorder %s149, %s152
    %p161 = scmp.eq.s32.totalorder %s18, 1
    %p162 = por %p160, %p161
    %p163 = scmp.ne.s32.totalorder %s152, %s153
    %p164 = scmp.eq.s32.totalorder %s18, 0
    %p165 = por %p163, %p164
    %p166 = scmp.ne.s32.totalorder %s152, %s153
    %p167 = scmp.eq.s32.totalorder %s19, 1
    %p168 = por %p166, %p167
    %p170 = scmp.ne.s32.totalorder %s153, %s169
    %p171 = scmp.eq.s32.totalorder %s19, 0
    %p172 = por %p170, %p171
    %s173 = ssub.s32 %s20, %s32
    %s174 = ssub.s32 %s21, %s28
    %s175 = sor.u32 %s173, %s174
    %p176 = scmp.eq.s32.totalorder %s175, 0
    %s178 = sadd.s32 %s177, 1
    %s179 = scalar_select %p176, %s177, %s178
    %p182 = pneg %p176
    %p183 = scmp.eq.s32.totalorder %s13, 1
    %p184 = por %p182, %p183
    %p185 = scmp.ne.s32.totalorder %s177, %s180
    %p186 = scmp.eq.s32.totalorder %s13, 0
    %p187 = por %p185, %p186
    %p188 = scmp.ne.s32.totalorder %s177, %s180
    %p189 = scmp.eq.s32.totalorder %s18, 1
    %p190 = por %p188, %p189
    %p191 = scmp.ne.s32.totalorder %s180, %s181
    %p192 = scmp.eq.s32.totalorder %s18, 0
    %p193 = por %p191, %p192
    %p194 = scmp.ne.s32.totalorder %s180, %s181
    %p195 = scmp.eq.s32.totalorder %s19, 1
    %p196 = por %p194, %p195
    %p198 = scmp.ne.s32.totalorder %s181, %s197
    %p199 = scmp.eq.s32.totalorder %s19, 0
    %p200 = por %p198, %p199
    %p201 = scmp.le.s32.totalorder 1, %s13
    %p202 = scmp.lt.s32.totalorder %s13, 3
    %p203 = pnand %p201, %p202
    %p204 = pneg %p203
    // Predicated region
    $region9: #{lanenet_forward.1} parent=5 // pred_check
      _
    $region10: #{lanenet_forward.1} parent=5 // pred_check_branch
      %206 = sbr.rel (%p203) target = $region12
    $region11: #{lanenet_forward.1} parent=5 // pred_region
      %s207 = ssub.s32 %s13, 1
      // Predicated region
      $region13: #{lanenet_forward.1} parent=11 // pred_check
        %p208 = pneg %p74
      $region14: #{lanenet_forward.1} parent=11 // pred_check_branch
        %210 = sbr.rel (%p208) target = $region16
      $region15: #{lanenet_forward.1} parent=11 // pred_region
        _
      $region16: #{lanenet_forward.1} parent=11 // pred_fallthru
        _
      // Predicated region
      $region17: #{lanenet_forward.1} parent=11 // pred_check
        %p211 = pneg %p95
      $region18: #{lanenet_forward.1} parent=11 // pred_check_branch
        %213 = sbr.rel (%p211) target = $region20
      $region19: #{lanenet_forward.1} parent=11 // pred_region
        _
      $region20: #{lanenet_forward.1} parent=11 // pred_fallthru
        _
      // Predicated region
      $region21: #{lanenet_forward.1} parent=11 // pred_check
        %p214 = pneg %p116
      $region22: #{lanenet_forward.1} parent=11 // pred_check_branch
        %216 = sbr.rel (%p214) target = $region24
      $region23: #{lanenet_forward.1} parent=11 // pred_region
        _
      $region24: #{lanenet_forward.1} parent=11 // pred_fallthru
        _
      // Predicated region
      $region25: #{lanenet_forward.1} parent=11 // pred_check
        %p217 = pneg %p137
      $region26: #{lanenet_forward.1} parent=11 // pred_check_branch
        %219 = sbr.rel (%p217) target = $region28
      $region27: #{lanenet_forward.1} parent=11 // pred_region
        _
      $region28: #{lanenet_forward.1} parent=11 // pred_fallthru
        _
    $region12: #{lanenet_forward.1} parent=5 // pred_fallthru
      _
    %p220 = scmp.lt.s32.totalorder %s13, 2
    // Predicated region
    $region29: #{lanenet_forward.1} parent=5 // pred_check
      %p221 = pneg %p220
    $region30: #{lanenet_forward.1} parent=5 // pred_check_branch
      %223 = sbr.rel (%p221) target = $region32
    $region31: #{lanenet_forward.1} parent=5 // pred_region
      // Predicated region
      $region33: #{lanenet_forward.1} parent=31 // pred_check
        %p224 = pneg %p47
      $region34: #{lanenet_forward.1} parent=31 // pred_check_branch
        %226 = sbr.rel (%p224) target = $region36
      $region35: #{lanenet_forward.1} parent=31 // pred_region
        %s227 = smul.u32 2, %s21
        %p228 = scmp.lt.s32.totalorder %s20, 1
        %s229 = scalar_select %p228, %s20, 1
        %p230 = scmp.lt.s32.totalorder %s227, 1
        %s231 = scalar_select %p230, %s227, 1
        %s232 = smul.addr %s229, 2
        %s233 = sadd.s32 %s231, %s232
        %s234 = smul.addr %s233, 4
        %s235 = scalar_lea.vmem %s0, %s234
        %s236 = smul.u32 2, %s21
      $region36: #{lanenet_forward.1} parent=31 // pred_fallthru
        _
    $region32: #{lanenet_forward.1} parent=5 // pred_fallthru
      _
    %p237 = scmp.le.s32.totalorder 1, %s13
    %p238 = scmp.lt.s32.totalorder %s13, 3
    %p239 = pnand %p237, %p238
    %p240 = pneg %p239
    // Predicated region
    $region37: #{lanenet_forward.1} parent=5 // pred_check
      _
    $region38: #{lanenet_forward.1} parent=5 // pred_check_branch
      %242 = sbr.rel (%p239) target = $region40
    $region39: #{lanenet_forward.1} parent=5 // pred_region
      %s243 = ssub.s32 %s13, 1
      %s244 = smul.u32 2, %s23
      %p245 = scmp.lt.s32.totalorder %s22, 1
      %s246 = scalar_select %p245, %s22, 1
      %p247 = scmp.lt.s32.totalorder %s244, 1
      %s248 = scalar_select %p247, %s244, 1
      %s249 = smul.addr %s246, 2
      %s250 = sadd.s32 %s248, %s249
      %s251 = smul.addr %s250, 4
      %s252 = scalar_lea.vmem %s0, %s251
      %p253 = pneg %p53
      %p254 = pneg %p50
      %p255 = pneg %p74
      %p256 = pneg %p71
      %p257 = pneg %p95
      %p258 = pneg %p92
      %p259 = pneg %p116
      %p260 = pneg %p113
      %p261 = pneg %p137
      %p262 = pneg %p134
      %p263 = pneg %p165
      %p264 = pneg %p162
      %s265 = smul.u32 2, %s23
      %p266 = scmp.lt.s32.totalorder %s22, 1
      %s267 = scalar_select %p266, %s22, 1
      %p268 = scmp.lt.s32.totalorder %s265, 1
      %s269 = scalar_select %p268, %s265, 1
      %s270 = smul.addr %s267, 2
      %s271 = sadd.s32 %s269, %s270
      %s272 = smul.addr %s271, 2
      %s273 = scalar_lea.vmem %s5, %s272
      %p274 = pneg %p193
      %p275 = pneg %p190
      %s276 = smul.u32 2, %s23
      %p277 = scmp.lt.s32.totalorder %s22, 1
      %s278 = scalar_select %p277, %s22, 1
      %p279 = scmp.lt.s32.totalorder %s276, 1
      %s280 = scalar_select %p279, %s276, 1
      %s281 = smul.addr %s278, 2
      %s282 = sadd.s32 %s280, %s281
      %s283 = smul.addr %s282, 4
      %s284 = scalar_lea.vmem %s6, %s283
      %s285 = smul.u32 2, %s23
      %p286 = scmp.lt.s32.totalorder %s22, 1
      %s287 = scalar_select %p286, %s22, 1
      %p288 = scmp.lt.s32.totalorder %s285, 1
      %s289 = scalar_select %p288, %s285, 1
      %s290 = smul.addr %s287, 2
      %s291 = sadd.s32 %s289, %s290
      %s292 = smul.addr %s291, 4
      %s293 = scalar_lea.vmem %s0, %s292
      %s294 = smul.u32 2, %s23
      %s295 = smul.u32 2, %s23
      %p296 = scmp.lt.s32.totalorder %s22, 1
      %s297 = scalar_select %p296, %s22, 1
      %p298 = scmp.lt.s32.totalorder %s295, 1
      %s299 = scalar_select %p298, %s295, 1
      %s300 = smul.addr %s297, 2
      %s301 = sadd.s32 %s299, %s300
      %s302 = smul.addr %s301, 2
      %s303 = scalar_lea.vmem %s5, %s302
      %s304 = smul.u32 2, %s23
      %s305 = smul.u32 2, %s23
      %p306 = scmp.lt.s32.totalorder %s22, 1
      %s307 = scalar_select %p306, %s22, 1
      %p308 = scmp.lt.s32.totalorder %s305, 1
      %s309 = scalar_select %p308, %s305, 1
      %s310 = smul.addr %s307, 2
      %s311 = sadd.s32 %s309, %s310
      %s312 = smul.addr %s311, 4
      %s313 = scalar_lea.vmem %s6, %s312
      %s314 = smul.u32 2, %s23
      %v315 = vld [vmem:[%s293] sm:$0xff]
      %v316 = vld [vmem:[%s1] sm:$0xff]
      %v317 = vld [vmem:[%s1 + $0x8] sm:$0xff]
      %v318 = vld [vmem:[%s1 + $0x10] sm:$0xff]
      %v319 = vld [vmem:[%s1 + $0x18] sm:$0xff]
      %v320 = vld [vmem:[%s2] sm:$0xff]
      %v321 = vld [vmem:[%s2 + $0x8] sm:$0xff]
      %v322 = vld [vmem:[%s2 + $0x10] sm:$0xff]
      %v323 = vld [vmem:[%s2 + $0x18] sm:$0xff]
      %325 = vset.pattern.permute.xlu0 0
      %326 = vperm.xlu0 %325, %v320
      %v327 = vpop.permute.xlu0 %326
      %330 = vset.pattern.permute.xlu0 0
      %331 = vperm.xlu0 %330, %v321
      %v332 = vpop.permute.xlu0 %331
      %335 = vset.pattern.permute.xlu0 0
      %336 = vperm.xlu0 %335, %v322
      %v337 = vpop.permute.xlu0 %336
      %340 = vset.pattern.permute.xlu0 0
      %341 = vperm.xlu0 %340, %v323
      %v342 = vpop.permute.xlu0 %341
      %v345 = vcombine.high %v315, %v315
      %vm346 = vcmask 31744
      %v348 = vsel %vm346, %v316, 0
      %v351 = vsel %vm346, %v317, 0
      %v354 = vsel %vm346, %v318, 0
      %v357 = vsel %vm346, %v319, 0
      %vm359 = vcmask 1043456
      %v360 = vsel %vm359, %v315, 0
      %v362 = vsel %vm359, %v345, 0
      %364 = vmatprep.subr.mxu0 %v362
      %365 = vmatpush1.msra.mxu0 %v360
      %366 = vmatprep.subr.mxu0 0.0
      %367 = vmatpush1.msra.mxu0 0.0
      %368 = vmatprep.subr.mxu0 0.0
      %369 = vmatpush1.msra.mxu0 0.0
      %370 = vmatprep.subr.mxu0 0.0
      %371 = vmatpush1.msra.mxu0 0.0
      %372 = vmatprep.subr.mxu0 0.0
      %373 = vmatpush1.msra.mxu0 0.0
      %374 = vmatprep.subr.mxu0 0.0
      %375 = vmatpush1.msra.mxu0 0.0
      %376 = vmatprep.subr.mxu0 0.0
      %377 = vmatpush1.msra.mxu0 0.0
      %378 = vmatprep.subr.mxu0 0.0
      %379 = vmatpush1.msra.mxu0 0.0
      %380 = vmatprep.subr.mxu0 0.0
      %381 = vmatpush1.msra.mxu0 0.0
      %382 = vmatprep.subr.mxu0 0.0
      %383 = vmatpush1.msra.mxu0 0.0
      %384 = vmatprep.subr.mxu0 0.0
      %385 = vmatpush1.msra.mxu0 0.0
      %386 = vmatprep.subr.mxu0 0.0
      %387 = vmatpush1.msra.mxu0 0.0
      %388 = vmatprep.subr.mxu0 0.0
      %389 = vmatpush1.msra.mxu0 0.0
      %390 = vmatprep.subr.mxu0 0.0
      %391 = vmatpush1.msra.mxu0 0.0
      %392 = vmatprep.subr.mxu0 0.0
      %393 = vmatpush1.msra.mxu0 0.0
      %394 = vmatprep.subr.mxu0 0.0
      %395 = vmatpush1.msra.mxu0 0.0
      %396 = vmatprep.subr.mxu0 0.0
      %397 = vmatpush1.msra.mxu0 0.0
      %398 = vmatprep.subr.mxu0 0.0
      %399 = vmatpush1.msra.mxu0 0.0
      %400 = vmatprep.subr.mxu0 0.0
      %401 = vmatpush1.msra.mxu0 0.0
      %402 = vmatprep.subr.mxu0 0.0
      %403 = vmatpush1.msra.mxu0 0.0
      %404 = vmatprep.subr.mxu0 0.0
      %405 = vmatpush1.msra.mxu0 0.0
      %406 = vmatprep.subr.mxu0 0.0
      %407 = vmatpush1.msra.mxu0 0.0
      %408 = vmatprep.subr.mxu0 0.0
      %409 = vmatpush1.msra.mxu0 0.0
      %410 = vmatprep.subr.mxu0 0.0
      %411 = vmatpush1.msra.mxu0 0.0
      %412 = vmatprep.subr.mxu0 0.0
      %413 = vmatpush1.msra.mxu0 0.0
      %414 = vmatprep.subr.mxu0 0.0
      %415 = vmatpush1.msra.mxu0 0.0
      %416 = vmatprep.subr.mxu0 0.0
      %417 = vmatpush1.msra.mxu0 0.0
      %418 = vmatprep.subr.mxu0 0.0
      %419 = vmatpush1.msra.mxu0 0.0
      %420 = vmatprep.subr.mxu0 0.0
      %421 = vmatpush1.msra.mxu0 0.0
      %422 = vmatprep.subr.mxu0 0.0
      %423 = vmatpush1.msra.mxu0 0.0
      %424 = vmatprep.subr.mxu0 0.0
      %425 = vmatpush1.msra.mxu0 0.0
      %426 = vmatprep.subr.mxu0 0.0
      %427 = vmatpush1.msra.mxu0 0.0
      %428 = vmatprep.mubr.f32.mxu0 0.0
      %429 = vmatmul.mubr.f32.gmra.mrb[0].mxu0 %v348
      %v430 = vpop.f32.mrb[0].mxu0
      %v431 = vadd.f32 %v327, %v430
      %v432 = vpop.f32.mrb[0].mxu0
      %v433 = vadd.f32 %v327, %v432
      %434 = vmatprep.mubr.f32.mxu0 0.0
      %435 = vmatmul.mubr.f32.gmra.mrb[0].mxu0 %v351
      %v436 = vpop.f32.mrb[0].mxu0
      %v437 = vadd.f32 %v332, %v436
      %v438 = vpop.f32.mrb[0].mxu0
      %v439 = vadd.f32 %v332, %v438
      %440 = vmatprep.mubr.f32.mxu0 0.0
      %441 = vmatmul.mubr.f32.gmra.mrb[0].mxu0 %v354
      %v442 = vpop.f32.mrb[0].mxu0
      %v443 = vadd.f32 %v337, %v442
      %v444 = vpop.f32.mrb[0].mxu0
      %v445 = vadd.f32 %v337, %v444
      %446 = vmatprep.mubr.f32.mxu0 0.0
      %447 = vmatmul.mubr.f32.gmra.mrb[0].mxu0 %v357
      %v448 = vpop.f32.mrb[0].mxu0
      %v449 = vadd.f32 %v342, %v448
      %v450 = vpop.f32.mrb[0].mxu0
      %v451 = vadd.f32 %v342, %v450
      %452 = vdwg.mxu0
      %v453 = vmax.f32 %v431, 0.0
      %v454 = vmax.f32 %v433, 0.0
      %v455 = vmax.f32 %v437, 0.0
      %v456 = vmax.f32 %v439, 0.0
      %v457 = vmax.f32 %v443, 0.0
      %v458 = vmax.f32 %v445, 0.0
      %v459 = vmax.f32 %v449, 0.0
      %v460 = vmax.f32 %v451, 0.0
      %v461 = vld [vmem:[%s3] sm:$0x3f]
      %v462 = vld [vmem:[%s4] sm:$0x3f]
      %464 = vset.pattern.permute.xlu0 0
      %465 = vperm.xlu0 %464, %v462
      %v466 = vpop.permute.xlu0 %465
      %vm468 = vcmask 261120
      %v470 = vsel %vm468, %v461, 0
      %472 = vmatprep.subr.mxu0 %v454
      %473 = vmatpush1.msra.mxu0 %v453
      %474 = vmatprep.subr.mxu0 %v456
      %475 = vmatpush1.msra.mxu0 %v455
      %476 = vmatprep.subr.mxu0 %v458
      %477 = vmatpush1.msra.mxu0 %v457
      %478 = vmatprep.subr.mxu0 %v460
      %479 = vmatpush1.msra.mxu0 %v459
      %480 = vmatprep.subr.mxu0 0.0
      %481 = vmatpush1.msra.mxu0 0.0
      %482 = vmatprep.subr.mxu0 0.0
      %483 = vmatpush1.msra.mxu0 0.0
      %484 = vmatprep.subr.mxu0 0.0
      %485 = vmatpush1.msra.mxu0 0.0
      %486 = vmatprep.subr.mxu0 0.0
      %487 = vmatpush1.msra.mxu0 0.0
      %488 = vmatprep.subr.mxu0 0.0
      %489 = vmatpush1.msra.mxu0 0.0
      %490 = vmatprep.subr.mxu0 0.0
      %491 = vmatpush1.msra.mxu0 0.0
      %492 = vmatprep.subr.mxu0 0.0
      %493 = vmatpush1.msra.mxu0 0.0
      %494 = vmatprep.subr.mxu0 0.0
      %495 = vmatpush1.msra.mxu0 0.0
      %496 = vmatprep.subr.mxu0 0.0
      %497 = vmatpush1.msra.mxu0 0.0
      %498 = vmatprep.subr.mxu0 0.0
      %499 = vmatpush1.msra.mxu0 0.0
      %500 = vmatprep.subr.mxu0 0.0
      %501 = vmatpush1.msra.mxu0 0.0
      %502 = vmatprep.subr.mxu0 0.0
      %503 = vmatpush1.msra.mxu0 0.0
      %504 = vmatprep.subr.mxu0 0.0
      %505 = vmatpush1.msra.mxu0 0.0
      %506 = vmatprep.subr.mxu0 0.0
      %507 = vmatpush1.msra.mxu0 0.0
      %508 = vmatprep.subr.mxu0 0.0
      %509 = vmatpush1.msra.mxu0 0.0
      %510 = vmatprep.subr.mxu0 0.0
      %511 = vmatpush1.msra.mxu0 0.0
      %512 = vmatprep.subr.mxu0 0.0
      %513 = vmatpush1.msra.mxu0 0.0
      %514 = vmatprep.subr.mxu0 0.0
      %515 = vmatpush1.msra.mxu0 0.0
      %516 = vmatprep.subr.mxu0 0.0
      %517 = vmatpush1.msra.mxu0 0.0
      %518 = vmatprep.subr.mxu0 0.0
      %519 = vmatpush1.msra.mxu0 0.0
      %520 = vmatprep.subr.mxu0 0.0
      %521 = vmatpush1.msra.mxu0 0.0
      %522 = vmatprep.subr.mxu0 0.0
      %523 = vmatpush1.msra.mxu0 0.0
      %524 = vmatprep.subr.mxu0 0.0
      %525 = vmatpush1.msra.mxu0 0.0
      %526 = vmatprep.subr.mxu0 0.0
      %527 = vmatpush1.msra.mxu0 0.0
      %528 = vmatprep.subr.mxu0 0.0
      %529 = vmatpush1.msra.mxu0 0.0
      %530 = vmatprep.subr.mxu0 0.0
      %531 = vmatpush1.msra.mxu0 0.0
      %532 = vmatprep.subr.mxu0 0.0
      %533 = vmatpush1.msra.mxu0 0.0
      %534 = vmatprep.subr.mxu0 0.0
      %535 = vmatpush1.msra.mxu0 0.0
      %536 = vmatprep.mubr.f32.mxu0 0.0
      %537 = vmatmul.mubr.f32.gmra.mrb[0].mxu0 %v470
      %v538 = vpop.f32.mrb[0].mxu0
      %v539 = vadd.f32 %v466, %v538
      %v540 = vpop.f32.mrb[0].mxu0
      %v541 = vadd.f32 %v466, %v540
      %542 = vdwg.mxu0
      %v543 = vxor.u32 %v539, 2147483648
      %v544 = vxor.u32 %v541, 2147483648
      %v545 = vmul.f32 %v543, 1.442695
      %v546 = vpow.pop %v545
      %v547 = vmul.f32 %v544, 1.442695
      %v548 = vpow.pop %v547
      %v549 = vadd.f32 %v546, 1.0
      %v550 = vadd.f32 %v548, 1.0
      %v551 = vrcp.pop %v549
      %v552 = vmul.f32 1.0, %v551
      %v553 = vrcp.pop %v550
      %v554 = vmul.f32 1.0, %v553
      %v557 = vcombine.low %v552, %v554
      %v559 = vunpack.c.l.s4 1983009808
      %v560 = vunpack.c.0.s8 %v559
      %v561 = vlaneseq
      %v562 = vshrl.u32 %v561, 7
      %v563 = vsub.s32 %v560, %v562
      %v564 = vrot.slane %v557, %v563
      %566 = vst [vmem:[%s303] sm:$0xf] %v564
      %v567 = vtanh.pop %v539
      %v568 = vtanh.pop %v541
      %v571 = vcombine.low %v567, %v568
      %v572 = vcombine.high %v567, %v568
      %vm573 = vcmask 1041408
      %vm574 = vcmask 1045508
      %vm575 = vmor %vm573, %vm574
      %v576 = vrot.slane %v571, 6
      %v577 = vrot.slane %v576, 4
      %v578 = vrot.slane %v572, 6
      %v579 = vsel %vm575, %v577, %v578
      %581 = vst [vmem:[%s313] sm:$0xff] %v579
      %s582 = smul.u32 2, %s23
      %p583 = scmp.lt.s32.totalorder %s22, 1
      %s584 = scalar_select %p583, %s22, 1
      %p585 = scmp.lt.s32.totalorder %s582, 1
      %s586 = scalar_select %p585, %s582, 1
      %s587 = smul.addr %s584, 2
      %s588 = sadd.s32 %s586, %s587
      %s589 = smul.addr %s588, 2
      %s590 = scalar_lea.vmem %s5, %s589
      %s591 = smul.u32 2, %s23
      %p592 = scmp.lt.s32.totalorder %s22, 1
      %s593 = scalar_select %p592, %s22, 1
      %p594 = scmp.lt.s32.totalorder %s591, 1
      %s595 = scalar_select %p594, %s591, 1
      %s596 = smul.addr %s593, 2
      %s597 = sadd.s32 %s595, %s596
      %s598 = smul.addr %s597, 4
      %s599 = scalar_lea.vmem %s6, %s598
      // Predicated region
      $region41: #{lanenet_forward.1} parent=39 // pred_check
        %p600 = pneg %p162
      $region42: #{lanenet_forward.1} parent=39 // pred_check_branch
        %602 = sbr.rel (%p600) target = $region44
      $region43: #{lanenet_forward.1} parent=39 // pred_region
        %s603 = smul.u32 2, %s23
      $region44: #{lanenet_forward.1} parent=39 // pred_fallthru
        _
      // Predicated region
      $region45: #{lanenet_forward.1} parent=39 // pred_check
        %p604 = pneg %p190
      $region46: #{lanenet_forward.1} parent=39 // pred_check_branch
        %606 = sbr.rel (%p604) target = $region48
      $region47: #{lanenet_forward.1} parent=39 // pred_region
        %s607 = smul.u32 2, %s23
      $region48: #{lanenet_forward.1} parent=39 // pred_fallthru
        _
    $region40: #{lanenet_forward.1} parent=5 // pred_fallthru
      _
    %p608 = scmp.le.s32.totalorder 2, %s13
    // Predicated region
    $region49: #{lanenet_forward.1} parent=5 // pred_check
      %p609 = pneg %p608
    $region50: #{lanenet_forward.1} parent=5 // pred_check_branch
      %611 = sbr.rel (%p609) target = $region52
    $region51: #{lanenet_forward.1} parent=5 // pred_region
      %s612 = ssub.s32 %s13, 2
      // Predicated region
      $region53: #{lanenet_forward.1} parent=51 // pred_check
        %p613 = pneg %p168
      $region54: #{lanenet_forward.1} parent=51 // pred_check_branch
        %615 = sbr.rel (%p613) target = $region56
      $region55: #{lanenet_forward.1} parent=51 // pred_region
        %s616 = smul.u32 2, %s25
        %p617 = scmp.lt.s32.totalorder %s24, 1
        %s618 = scalar_select %p617, %s24, 1
        %p619 = scmp.lt.s32.totalorder %s616, 1
        %s620 = scalar_select %p619, %s616, 1
        %s621 = smul.addr %s618, 2
        %s622 = sadd.s32 %s620, %s621
        %s623 = smul.addr %s622, 2
        %s624 = scalar_lea.vmem %s5, %s623
      $region56: #{lanenet_forward.1} parent=51 // pred_fallthru
        _
      // Predicated region
      $region57: #{lanenet_forward.1} parent=51 // pred_check
        %p625 = pneg %p196
      $region58: #{lanenet_forward.1} parent=51 // pred_check_branch
        %627 = sbr.rel (%p625) target = $region60
      $region59: #{lanenet_forward.1} parent=51 // pred_region
        %s628 = smul.u32 2, %s25
        %p629 = scmp.lt.s32.totalorder %s24, 1
        %s630 = scalar_select %p629, %s24, 1
        %p631 = scmp.lt.s32.totalorder %s628, 1
        %s632 = scalar_select %p631, %s628, 1
        %s633 = smul.addr %s630, 2
        %s634 = sadd.s32 %s632, %s633
        %s635 = smul.addr %s634, 4
        %s636 = scalar_lea.vmem %s6, %s635
      $region60: #{lanenet_forward.1} parent=51 // pred_fallthru
        _
    $region52: #{lanenet_forward.1} parent=5 // pred_fallthru
      _
  $region6: #{lanenet_forward.1} parent=0 // loop_footer
    %s17 = sadd.s32 1, %s13
  $region7: #{lanenet_forward.1} parent=0 // loop_footer_branch
    %12 = sbr.rel target = $region3
  $region8: #{lanenet_forward.1} parent=0 // loop_exit
    _

</llo_original>
